<compile_context>
chip_gen: v7x
topology: tpu7x:2x2x1
jax: 0.10.0
libtpu: 0.0.40
codegen_flags: <defaults>
</compile_context>

<pallas_src>
import math
from functools import partial

import jax
import jax.numpy as jnp
import numpy as np
from jax.experimental import pallas as pl
from jax.experimental.pallas import tpu as pltpu

_LANE_CANDIDATES = (1024, 896, 768, 640, 512, 384, 256, 128)


def asymmetric_linear_quantization_params(num_bits, sat_min, sat_max):
    """HAWQ-style asymmetric params, computed host-side in float32 (no sync)."""
    sat_min = np.float32(sat_min)
    sat_max = np.float32(sat_max)
    levels = np.float32(2.0 ** num_bits - 1.0)
    scale = levels / np.maximum(sat_max - sat_min, np.float32(1e-8))
    zero_point = np.float32(np.round(scale * sat_min)) + np.float32(2.0 ** (num_bits - 1))
    return float(scale), float(zero_point)


def _make_quant_kernel(scale, zero_point, n):
    """Elementwise fake-quant kernel body; params baked as f32 constants."""

    def kernel(x_ref, o_ref):
        x = x_ref[...].astype(jnp.float32)
        q = jnp.round(scale * x - zero_point)
        # clamp(q, -n, n-1) == 0.5*(|q+n| - |q-(n-1)| - 1) from the reference,
        # but with 2 VALU ops instead of the abs trick.
        q = jnp.clip(q, -n, n - 1.0)
        o_ref[...] = ((q + zero_point) / scale).astype(o_ref.dtype)

    return kernel


def _fake_quant_jnp(x, scale, zero_point, n):
    """Plain-jnp path for the <128-element non-lane-aligned remainder."""
    q = jnp.round(scale * x.astype(jnp.float32) - zero_point)
    q = jnp.clip(q, -n, n - 1.0)
    return ((q + zero_point) / scale).astype(x.dtype)


def _select_tiling_params():
    """Returns (target_block_bytes, vmem_limit_bytes) tuned per TPU generation."""
    try:
        vmem_phys = int(pltpu.get_tpu_info().vmem_capacity_bytes)
    except Exception:
        vmem_phys = 128 << 20  # assume v5e/v6e-class if the query fails
    if 0 < vmem_phys <= (64 << 20):
        # v7x-class: ~3.2 TB/s HBM needs bigger blocks to hide the ~0.35us/step
        # grid overhead. 8 MiB blocks -> 32 MiB double-buffered in+out; raise
        # the scoped-VMEM budget (64 MiB physical per TC).
        return 8 << 20, 48 << 20
    # v5e / v6e (128 MiB physical VMEM): 4 MiB blocks -> 16 MiB in+out when
    # double-buffered; the explicit 32 MiB limit covers v5e's 16 MiB default.
    return 4 << 20, 32 << 20


def _choose_layout(n_elems, itemsize, target_block_bytes):
    """Pick (lane, rows, block_rows) for a lane-aligned element count."""
    lane = 128
    for cand in _LANE_CANDIDATES:
        if n_elems % cand == 0:
            lane = cand
            break
    rows = n_elems // lane
    target_elems = max(target_block_bytes // itemsize, 8 * lane)
    block_rows = max(8, (target_elems // lane) // 8 * 8)
    if block_rows >= rows:
        if rows >= 16:
            # Keep >=2 grid blocks so the "parallel" axis feeds both v7x
            # TensorCores even for small/medium activations.
            block_rows = ((rows + 1) // 2 + 7) // 8 * 8
        else:
            # Single block covering the full row extent (a block dim equal to
            # the full array dim satisfies the (8,128) constraint).
            block_rows = rows
    return lane, rows, block_rows


def _run_slab(flat_main, scale, zero_point, n, donate):
    """Run the Pallas kernel over a flat, lane-aligned slab; returns flat out."""
    n_elems = flat_main.shape[0]
    itemsize = jnp.dtype(flat_main.dtype).itemsize
    block_bytes, vmem_limit = _select_tiling_params()
    lane, rows, block_rows = _choose_layout(n_elems, itemsize, block_bytes)
    x2d = flat_main.reshape(rows, lane)

    extra = {"input_output_aliases": {0: 0}} if donate else {}
    out2d = pl.pallas_call(
        _make_quant_kernel(scale, zero_point, n),
        out_shape=jax.ShapeDtypeStruct((rows, lane), flat_main.dtype),
        grid_spec=pltpu.PrefetchScalarGridSpec(
            num_scalar_prefetch=0,
            grid=(pl.cdiv(rows, block_rows),),
            in_specs=[pl.BlockSpec((block_rows, lane), lambda i: (i, 0))],
            out_specs=pl.BlockSpec((block_rows, lane), lambda i: (i, 0)),
        ),
        # Parallel row axis: neutral on v5e/v6e, shards across both TCs on v7x.
        compiler_params=pltpu.CompilerParams(
            dimension_semantics=("parallel",),
            vmem_limit_bytes=vmem_limit,
        ),
        **extra,
    )(x2d)
    return out2d.reshape(-1)


@partial(jax.jit, static_argnames=("a_bit", "range_left", "range_right", "donate"))
def _quant_forward(inputs, *, a_bit, range_left, range_right, donate=False):
    scale, zero_point = asymmetric_linear_quantization_params(
        a_bit, range_left, range_right)
    n = float(2 ** (a_bit - 1))

    orig_shape = inputs.shape
    total = math.prod(orig_shape)
    flat = inputs.reshape(-1)

    main = (total // 128) * 128
    tail = total - main

    if tail == 0:
        # Zero-copy path: reshape is a free bitcast, no pad/slice round trip.
        out_flat = _run_slab(flat, scale, zero_point, n, donate)
    elif main == 0:
        # Fewer than one lane-row of data: not worth a kernel launch.
        out_flat = _fake_quant_jnp(flat, scale, zero_point, n)
    else:
        # Lane-aligned prefix through the kernel, tiny remainder in plain jnp.
        main_out = _run_slab(flat[:main], scale, zero_point, n, donate)
        tail_out = _fake_quant_jnp(flat[main:], scale, zero_point, n)
        out_flat = jnp.concatenate([main_out, tail_out])

    return out_flat.reshape(orig_shape)


class Quant:
    """JAX/Pallas port of the PyTorch Quant module (forward pass only)."""

    def __init__(self, range_left=-6.0, range_right=6.0, dim=128):
        self.range_left = float(range_left)
        self.range_right = float(range_right)
        del dim  # unused in forward, kept for signature parity
        # TODO(synk): AsymmetricQuantFunction's straight-through-estimator
        # backward is not ported; autodiff through round/clip gives zero grad.

    def __call__(self, inputs, a_bit, donate=False):
        # donate=True adds input_output_aliases={0: 0} on the pallas_call for
        # callers that no longer need the un-quantized activation buffer.
        return _quant_forward(
            inputs,
            a_bit=int(a_bit),
            range_left=self.range_left,
            range_right=self.range_right,
            donate=bool(donate),
        )


def _reference(x, a_bit, range_left, range_right):
    """Pure-JAX reference mirroring the PyTorch forward exactly."""
    rl = jnp.asarray(range_left, jnp.float32)
    rr = jnp.asarray(range_right, jnp.float32)
    levels = 2.0 ** a_bit - 1.0
    scale = levels / jnp.clip(rr - rl, 1e-8, None)
    zero_point = jnp.round(scale * rl) + 2.0 ** (a_bit - 1)
    # transpose(1,-1) ... transpose(1,-1) cancels for scalar scale/zero_point.
    q = jnp.round(scale * x.astype(jnp.float32) - zero_point)
    n = 2.0 ** (a_bit - 1)
    q1 = 0.5 * (jnp.abs(-q - n) - jnp.abs(q - (n - 1.0)) - 1.0)
    return ((q1 + zero_point) / scale).astype(x.dtype)


if __name__ == "__main__":
    key = jax.random.PRNGKey(0)
    quant = Quant(range_left=-6.0, range_right=6.0, dim=128)
    a_bit = 4

    # NCHW conv activation, lane-aligned case (2*4*16*16 = 2048 elements).
    x = jax.random.normal(key, (2, 4, 16, 16), dtype=jnp.float32) * 4.0
    y = jax.block_until_ready(quant(x, a_bit))
    y_ref = _reference(x, a_bit, quant.range_left, quant.range_right)
    assert y.shape == x.shape and y.dtype == x.dtype
    assert jnp.allclose(y, y_ref, atol=1e-5, rtol=1e-5), "mismatch vs reference (f32)"

    # Odd-sized bf16 tensor: exercises the lane-aligned-prefix + jnp-tail path
    # and the in-kernel dtype cast.
    x2 = (jax.random.normal(jax.random.PRNGKey(1), (2, 3, 7, 5),
                            dtype=jnp.float32) * 4.0).astype(jnp.bfloat16)
    y2 = jax.block_until_ready(quant(x2, a_bit))
    y2_ref = _reference(x2, a_bit, quant.range_left, quant.range_right)
    assert y2.shape == x2.shape and y2.dtype == x2.dtype
    assert jnp.allclose(y2.astype(jnp.float32), y2_ref.astype(jnp.float32),
                        atol=2e-2, rtol=2e-2), "mismatch vs reference (bf16)"

    print("KERNEL_OK")
</pallas_src>

<mosaic_0001>
module attributes {stable_mosaic.version = 11 : i64} {
  func.func @kernel(%arg0: i32, %arg1: memref<2x1024xf32, #tpu.memory_space<vmem>>, %arg2: memref<2x1024xf32, #tpu.memory_space<vmem>>) attributes {dimension_semantics = [#tpu.dimension_semantics<parallel>], iteration_bounds = array<i64: 1>, scalar_prefetch = 0 : i64, scratch_operands = 0 : i64, tpu.core_type = #tpu.core_type<tc>, window_params = [{transform_indices = @transform_0, window_bounds = array<i64: 2, 1024>}, {transform_indices = @transform_1, window_bounds = array<i64: 2, 1024>}]} {
    %c0 = arith.constant 0 : index
    %c0_0 = arith.constant 0 : index
    %0 = vector.load %arg1[%c0, %c0_0] : memref<2x1024xf32, #tpu.memory_space<vmem>>, vector<2x1024xf32>
    %cst = arith.constant 1.250000e+00 : f32
    %1 = vector.broadcast %cst : f32 to vector<2x1024xf32>
    %2 = arith.mulf %1, %0 : vector<2x1024xf32>
    %cst_1 = arith.constant 0.000000e+00 : f32
    %3 = vector.broadcast %cst_1 : f32 to vector<2x1024xf32>
    %4 = arith.subf %2, %3 : vector<2x1024xf32>
    %5 = math.roundeven %4 : vector<2x1024xf32>
    %cst_2 = arith.constant -8.000000e+00 : f32
    %cst_3 = arith.constant 7.000000e+00 : f32
    %6 = vector.broadcast %cst_2 : f32 to vector<2x1024xf32>
    %7 = arith.maximumf %6, %5 : vector<2x1024xf32>
    %8 = vector.broadcast %cst_3 : f32 to vector<2x1024xf32>
    %9 = arith.minimumf %8, %7 : vector<2x1024xf32>
    %cst_4 = arith.constant 0.000000e+00 : f32
    %10 = vector.broadcast %cst_4 : f32 to vector<2x1024xf32>
    %11 = arith.addf %9, %10 : vector<2x1024xf32>
    %cst_5 = arith.constant 1.250000e+00 : f32
    %12 = vector.broadcast %cst_5 : f32 to vector<2x1024xf32>
    %13 = arith.divf %11, %12 : vector<2x1024xf32>
    %c0_6 = arith.constant 0 : index
    %c0_7 = arith.constant 0 : index
    %14 = vector.load %arg2[%c0_6, %c0_7] : memref<2x1024xf32, #tpu.memory_space<vmem>>, vector<2x1024xf32>
    tpu.vector_store %arg2[%c0_6, %c0_7], %13 {strides = array<i32>} : memref<2x1024xf32, #tpu.memory_space<vmem>>, vector<2x1024xf32>,
    return
  }
  func.func @transform_0(%arg0: i32) -> (i32, i32) {
    %c0_i32 = arith.constant 0 : i32
    %c0_i32_0 = arith.constant 0 : i32
    return %arg0, %c0_i32 : i32, i32
  }
  func.func @transform_1(%arg0: i32) -> (i32, i32) {
    %c0_i32 = arith.constant 0 : i32
    %c0_i32_0 = arith.constant 0 : i32
    return %arg0, %c0_i32 : i32, i32
  }
}

</mosaic_0001>

<llo_original>
// kernel: _quant_forward.1
$region0: #{_quant_forward.1}
  #allocation0 [shape = 'u32[]', space=smem, size = 0x4, offset = 0x4, fixed_abs, tag = 'smem constant byte address 0x4 - core index']
  #allocation1 [shape = 'u32[144,128]{1,0:T(1,128)}', space=vmem, size = 0x12000, scoped, tag = 'internal scratch']
  %s0 = inlined_call_operand.vmem [shape: f32[2,1024], index: 0, kind: input, shape index: {}]
  %s1 = inlined_call_operand.vmem [shape: f32[2,1024], index: 1, kind: output, shape index: {}]
  %s2 = sld [smem:[#allocation0]]
  $region14: #{_quant_forward.1} parent=0
    _
  %s4 = ssub.s32 1, %s2
  %s5 = scalar_select 0, %s4, %s2
  // Predicated region
  $region2: #{_quant_forward.1} parent=0 // pred_check
    _
  $region3: #{_quant_forward.1} parent=0 // pred_check_branch
    %7 = sbr.rel (0) target = $region5
  $region4: #{_quant_forward.1} parent=0 // pred_region
    _
  $region5: #{_quant_forward.1} parent=0 // pred_fallthru
    _
  %v8 = vld [vmem:[%s0] sm:$0xff]
  %v9 = vld [vmem:[%s0 + $0x8] sm:$0xff]
  %v10 = vmul.f32 %v8, 1.25
  %v11 = vmul.f32 %v9, 1.25
  %v12 = vround.ne.pseudo %v10
  %v13 = vround.ne.pseudo %v11
  %v14 = vmax.f32 %v12, -8.0
  %v15 = vmax.f32 %v13, -8.0
  %v16 = vmin.f32 %v14, 7.0
  %v17 = vmin.f32 %v15, 7.0
  %v18 = vadd.f32 %v16, 0.0
  %v19 = vadd.f32 %v17, 0.0
  %v20 = vrcp.pop 1.25
  %v21 = vmul.f32 %v18, %v20
  %v22 = vmul.f32 %v19, %v20
  %23 = vst [vmem:[%s1] sm:$0xff] %v21
  %24 = vst [vmem:[%s1 + $0x8] sm:$0xff] %v22
  // Predicated region
  $region6: #{_quant_forward.1} parent=0 // pred_check
    _
  $region7: #{_quant_forward.1} parent=0 // pred_check_branch
    %26 = sbr.rel (0) target = $region9
  $region8: #{_quant_forward.1} parent=0 // pred_region
    _
  $region9: #{_quant_forward.1} parent=0 // pred_fallthru
    _
  // Predicated region
  $region10: #{_quant_forward.1} parent=0 // pred_check
    _
  $region11: #{_quant_forward.1} parent=0 // pred_check_branch
    %28 = sbr.rel (0) target = $region13
  $region12: #{_quant_forward.1} parent=0 // pred_region
    _
  $region13: #{_quant_forward.1} parent=0 // pred_fallthru
    _

</llo_original>
